<compile_context>
chip_gen: v5e
topology: v5e:2x2
jax: 0.10.0
libtpu: 0.0.40
codegen_flags: <defaults>
</compile_context>

<pallas_src>
import functools

import jax
import jax.numpy as jnp
from jax.experimental import pallas as pl
from jax.experimental.pallas import tpu as pltpu


# ----------------------------- kernels ------------------------------------ #
def _linear_relu_kernel_f32out(x_ref, w_ref, b_ref, o_ref):
    """Output tile (i, j) is constant across the K grid axis, so for an f32
    output we accumulate straight into it — no scratch, no final copy."""
    k = pl.program_id(2)

    @pl.when(k == 0)
    def _():
        o_ref[...] = jnp.zeros_like(o_ref)

    o_ref[...] += jnp.dot(
        x_ref[...], w_ref[...], preferred_element_type=jnp.float32
    )

    @pl.when(k == pl.num_programs(2) - 1)
    def _():
        # f32 epilogue: bias add (broadcast (1,tn) -> (tm,tn)) + relu.
        o_ref[...] = jnp.maximum(o_ref[...] + b_ref[...], 0.0)


def _linear_relu_kernel_scratch(x_ref, w_ref, b_ref, o_ref, acc_ref):
    """Variant with an f32 VMEM accumulator, for narrow (e.g. bf16) outputs."""
    k = pl.program_id(2)

    @pl.when(k == 0)
    def _():
        acc_ref[...] = jnp.zeros_like(acc_ref)

    acc_ref[...] += jnp.dot(
        x_ref[...], w_ref[...], preferred_element_type=jnp.float32
    )

    @pl.when(k == pl.num_programs(2) - 1)
    def _():
        acc = acc_ref[...] + b_ref[...]
        o_ref[...] = jnp.maximum(acc, 0.0).astype(o_ref.dtype)


# --------------------------- tiling helpers -------------------------------- #
def _round_up(x, m):
    return (x + m - 1) // m * m


def _sublane(dtype):
    dtype = jnp.dtype(dtype)
    if dtype == jnp.dtype(jnp.bfloat16):
        return 16
    if dtype.itemsize == 1:  # int8 / fp8
        return 32
    return 8  # f32


def _choose_tile(dim, max_tile, align):
    """Pick (tile, padded_dim) with padded_dim % tile == 0.

    If the dim fits in one tile, use the full extent (no padding, no copy).
    Otherwise scan aligned tile sizes and pick the one that minimizes padded
    work (ties go to the larger tile — which also prefers 256-multiples on
    v6e/v7x when they cost no extra padding)."""
    if dim <= max_tile:
        return dim, dim
    best_t = align
    best_p = _round_up(dim, align)
    t = (max_tile // align) * align
    while t >= align:
        p = _round_up(dim, t)
        if p < best_p:
            best_t, best_p = t, p
        t -= align
    return best_t, best_p


# ------------------------------ wrapper ------------------------------------ #
def my_linear(x, weight, bias, *, compute_dtype=jnp.bfloat16,
              tm=512, tn=512, tk=1024):
    """relu(x @ weight + bias) — matches torch MyLinear.forward."""
    M, K = x.shape
    K2, N = weight.shape
    assert K == K2, "x.shape[1] must equal weight.shape[0]"
    assert bias.shape == (N,)

    # Force a float output dtype (torch Linear semantics).
    out_dtype = x.dtype if jnp.issubdtype(x.dtype, jnp.floating) else jnp.float32

    # MXU operand dtype.  bf16 operands + f32 accumulation is the big lever
    # on every TPU generation; pass compute_dtype=jnp.float32 for bit accuracy.
    if compute_dtype is not None and jnp.issubdtype(x.dtype, jnp.floating):
        cdt = jnp.dtype(compute_dtype)
    else:
        cdt = jnp.dtype(x.dtype)

    sub = _sublane(cdt)

    # Minimal-padding tile selection (grow tk before tm/tn: it does not grow
    # the accumulator/output tile, only the double-buffered X/W inputs).
    tm, Mp = _choose_tile(M, tm, sub)
    tn, Np = _choose_tile(N, tn, 128)
    tk, Kp = _choose_tile(K, tk, 128)

    # v7x has 2 TensorCores: make sure at least one "parallel" axis has >= 2
    # blocks so both cores get work (harmless on 1-TC v5e/v6e: one extra step).
    if (Mp // tm) * (Np // tn) == 1:
        if tn % 256 == 0:
            tn //= 2
        elif tm % (2 * sub) == 0:
            tm //= 2

    # Pad / cast only when strictly needed.
    # TODO(synk): in a real module the weight/bias bf16 cast + padding would be
    # done once at parameter init instead of per forward call.
    x_p = x.astype(cdt)
    if (Mp, Kp) != (M, K):
        x_p = jnp.pad(x_p, ((0, Mp - M), (0, Kp - K)))
    w_p = weight.astype(cdt)
    if (Kp, Np) != (K, N):
        w_p = jnp.pad(w_p, ((0, Kp - K), (0, Np - N)))
    b_p = bias.astype(jnp.float32)
    if Np != N:
        b_p = jnp.pad(b_p, (0, Np - N))
    b_p = b_p.reshape(1, Np)

    grid = (Mp // tm, Np // tn, Kp // tk)

    use_scratch = jnp.dtype(out_dtype) != jnp.dtype(jnp.float32)
    kernel = _linear_relu_kernel_scratch if use_scratch else _linear_relu_kernel_f32out
    scratch = [pltpu.VMEM((tm, tn), jnp.float32)] if use_scratch else []

    out_itemsize = jnp.dtype(out_dtype).itemsize
    cost = pl.CostEstimate(
        flops=2 * M * N * K,
        transcendentals=0,
        bytes_accessed=(x_p.size * x_p.dtype.itemsize
                        + w_p.size * w_p.dtype.itemsize
                        + b_p.size * b_p.dtype.itemsize
                        + Mp * Np * out_itemsize),
    )

    out = pl.pallas_call(
        kernel,
        out_shape=jax.ShapeDtypeStruct((Mp, Np), out_dtype),
        grid_spec=pltpu.PrefetchScalarGridSpec(
            num_scalar_prefetch=0,
            grid=grid,
            in_specs=[
                pl.BlockSpec((tm, tk), lambda i, j, k: (i, k)),  # X tile
                pl.BlockSpec((tk, tn), lambda i, j, k: (k, j)),  # W tile
                pl.BlockSpec((1, tn), lambda i, j, k: (0, j)),   # bias slice
            ],
            out_specs=pl.BlockSpec((tm, tn), lambda i, j, k: (i, j)),
            scratch_shapes=scratch,
        ),
        compiler_params=pltpu.CompilerParams(
            dimension_semantics=("parallel", "parallel", "arbitrary"),
            vmem_limit_bytes=64 * 1024 * 1024,  # tiles use ~7-11 MiB; plenty of headroom
        ),
        cost_estimate=cost,
    )(x_p, w_p, b_p)

    if (Mp, Np) != (M, N):
        out = out[:M, :N]
    return out


# ------------------------------- demo -------------------------------------- #
if __name__ == "__main__":
    key = jax.random.PRNGKey(0)

    # 1) Small aligned shapes matching the module (bf16 compute, f32 in/out).
    batch, in_units, units = 8, 32, 128
    kx, kw, kb = jax.random.split(key, 3)
    x = jax.random.normal(kx, (batch, in_units), dtype=jnp.float32)
    weight = jax.random.normal(kw, (in_units, units), dtype=jnp.float32)
    bias = jax.random.normal(kb, (units,), dtype=jnp.float32)

    out = my_linear(x, weight, bias)
    jax.block_until_ready(out)
    ref = jnp.maximum(x @ weight + bias, 0.0)
    assert out.shape == (batch, units)
    assert jnp.allclose(out, ref, atol=1e-1, rtol=2e-2)

    # 2) Misaligned shapes: full-extent tiles, no padding copies.
    b2, k2, n2 = 10, 40, 200
    kx2, kw2, kb2 = jax.random.split(jax.random.PRNGKey(1), 3)
    x2 = jax.random.normal(kx2, (b2, k2), dtype=jnp.float32)
    w2 = jax.random.normal(kw2, (k2, n2), dtype=jnp.float32)
    bb2 = jax.random.normal(kb2, (n2,), dtype=jnp.float32)

    out2 = my_linear(x2, w2, bb2)
    jax.block_until_ready(out2)
    ref2 = jnp.maximum(x2 @ w2 + bb2, 0.0)
    assert out2.shape == (b2, n2)
    assert jnp.allclose(out2, ref2, atol=1e-1, rtol=2e-2)

    # 3) bf16 activations/weights -> bf16 output (exercises the scratch kernel).
    kx3, kw3, kb3 = jax.random.split(jax.random.PRNGKey(2), 3)
    x3 = jax.random.normal(kx3, (batch, in_units), dtype=jnp.bfloat16)
    w3 = jax.random.normal(kw3, (in_units, units), dtype=jnp.bfloat16)
    b3 = jax.random.normal(kb3, (units,), dtype=jnp.float32)

    out3 = my_linear(x3, w3, b3)
    jax.block_until_ready(out3)
    ref3 = jnp.maximum(x3.astype(jnp.float32) @ w3.astype(jnp.float32) + b3, 0.0)
    assert out3.dtype == jnp.bfloat16
    assert jnp.allclose(out3.astype(jnp.float32), ref3, atol=1e-1, rtol=2e-2)

    # 4) Medium shapes: multi-block grid with K-accumulation and N padding/slice
    #    (f32 compute path for a tight numerical check).
    b4, k4, n4 = 256, 1280, 800
    kx4, kw4, kb4 = jax.random.split(jax.random.PRNGKey(3), 3)
    x4 = jax.random.normal(kx4, (b4, k4), dtype=jnp.float32)
    w4 = jax.random.normal(kw4, (k4, n4), dtype=jnp.float32)
    bb4 = jax.random.normal(kb4, (n4,), dtype=jnp.float32)

    out4 = my_linear(x4, w4, bb4, compute_dtype=jnp.float32)
    jax.block_until_ready(out4)
    ref4 = jnp.maximum(x4 @ w4 + bb4, 0.0)
    assert out4.shape == (b4, n4)
    assert jnp.allclose(out4, ref4, atol=1e-3, rtol=1e-3)

    print("KERNEL_OK")
</pallas_src>

<mosaic_0001>
module attributes {stable_mosaic.version = 11 : i64} {
  func.func @_linear_relu_kernel_f32out(%arg0: i32, %arg1: i32, %arg2: i32, %arg3: memref<8x32xbf16, #tpu.memory_space<vmem>>, %arg4: memref<32x128xbf16, #tpu.memory_space<vmem>>, %arg5: memref<1x128xf32, #tpu.memory_space<vmem>>, %arg6: memref<8x128xf32, #tpu.memory_space<vmem>>) attributes {dimension_semantics = [#tpu.dimension_semantics<parallel>, #tpu.dimension_semantics<parallel>, #tpu.dimension_semantics<arbitrary>], iteration_bounds = array<i64: 1, 1, 1>, scalar_prefetch = 0 : i64, scratch_operands = 0 : i64, tpu.core_type = #tpu.core_type<tc>, window_params = [{transform_indices = @transform_0, window_bounds = array<i64: 8, 32>}, {transform_indices = @transform_1, window_bounds = array<i64: 32, 128>}, {transform_indices = @transform_2, window_bounds = array<i64: 1, 128>}, {transform_indices = @transform_3, window_bounds = array<i64: 8, 128>}]} {
    %c0_i32 = arith.constant 0 : i32
    %0 = arith.cmpi eq, %arg2, %c0_i32 : i32
    %1 = arith.extui %0 : i1 to i32
    %c0_i32_0 = arith.constant 0 : i32
    %2 = arith.cmpi ne, %1, %c0_i32_0 : i32
    scf.if %2 {
      %cst_10 = arith.constant 0.000000e+00 : f32
      %12 = vector.broadcast %cst_10 : f32 to vector<8x128xf32>
      %c0_11 = arith.constant 0 : index
      %c0_12 = arith.constant 0 : index
      %13 = vector.load %arg6[%c0_11, %c0_12] : memref<8x128xf32, #tpu.memory_space<vmem>>, vector<8x128xf32>
      tpu.vector_store %arg6[%c0_11, %c0_12], %12 {strides = array<i32>} : memref<8x128xf32, #tpu.memory_space<vmem>>, vector<8x128xf32>,
    } else {
    }
    %c0 = arith.constant 0 : index
    %c0_1 = arith.constant 0 : index
    %3 = vector.load %arg6[%c0, %c0_1] : memref<8x128xf32, #tpu.memory_space<vmem>>, vector<8x128xf32>
    %c0_2 = arith.constant 0 : index
    %c0_3 = arith.constant 0 : index
    %4 = vector.load %arg3[%c0_2, %c0_3] : memref<8x32xbf16, #tpu.memory_space<vmem>>, vector<8x32xbf16>
    %c0_4 = arith.constant 0 : index
    %c0_5 = arith.constant 0 : index
    %5 = vector.load %arg4[%c0_4, %c0_5] : memref<32x128xbf16, #tpu.memory_space<vmem>>, vector<32x128xbf16>
    %cst = arith.constant dense<0.000000e+00> : vector<8x128xf32>
    %6 = tpu.matmul %4, %5, %cst {dimension_numbers = #tpu.dot_dimension_numbers<[1], [0], [0], [1], [0, 0, 1, 1], [], []>} : vector<8x32xbf16>, vector<32x128xbf16>, vector<8x128xf32> -> vector<8x128xf32>
    %7 = arith.addf %3, %6 : vector<8x128xf32>
    %c0_6 = arith.constant 0 : index
    %c0_7 = arith.constant 0 : index
    %8 = vector.load %arg6[%c0_6, %c0_7] : memref<8x128xf32, #tpu.memory_space<vmem>>, vector<8x128xf32>
    tpu.vector_store %arg6[%c0_6, %c0_7], %7 {strides = array<i32>} : memref<8x128xf32, #tpu.memory_space<vmem>>, vector<8x128xf32>,
    %c0_i32_8 = arith.constant 0 : i32
    %9 = arith.cmpi eq, %arg2, %c0_i32_8 : i32
    %10 = arith.extui %9 : i1 to i32
    %c0_i32_9 = arith.constant 0 : i32
    %11 = arith.cmpi ne, %10, %c0_i32_9 : i32
    scf.if %11 {
      %c0_10 = arith.constant 0 : index
      %c0_11 = arith.constant 0 : index
      %12 = vector.load %arg6[%c0_10, %c0_11] : memref<8x128xf32, #tpu.memory_space<vmem>>, vector<8x128xf32>
      %c0_12 = arith.constant 0 : index
      %c0_13 = arith.constant 0 : index
      %13 = vector.load %arg5[%c0_12, %c0_13] : memref<1x128xf32, #tpu.memory_space<vmem>>, vector<1x128xf32>
      %14 = vector.broadcast %13 : vector<1x128xf32> to vector<8x128xf32>
      %15 = arith.addf %12, %14 : vector<8x128xf32>
      %cst_14 = arith.constant 0.000000e+00 : f32
      %16 = vector.broadcast %cst_14 : f32 to vector<8x128xf32>
      %17 = arith.maximumf %15, %16 : vector<8x128xf32>
      %c0_15 = arith.constant 0 : index
      %c0_16 = arith.constant 0 : index
      %18 = vector.load %arg6[%c0_15, %c0_16] : memref<8x128xf32, #tpu.memory_space<vmem>>, vector<8x128xf32>
      tpu.vector_store %arg6[%c0_15, %c0_16], %17 {strides = array<i32>} : memref<8x128xf32, #tpu.memory_space<vmem>>, vector<8x128xf32>,
    } else {
    }
    return
  }
  func.func @transform_0(%arg0: i32, %arg1: i32, %arg2: i32) -> (i32, i32) {
    %c0_i32 = arith.constant 0 : i32
    return %arg0, %arg2 : i32, i32
  }
  func.func @transform_1(%arg0: i32, %arg1: i32, %arg2: i32) -> (i32, i32) {
    %c0_i32 = arith.constant 0 : i32
    return %arg2, %arg1 : i32, i32
  }
  func.func @transform_2(%arg0: i32, %arg1: i32, %arg2: i32) -> (i32, i32) {
    %c0_i32 = arith.constant 0 : i32
    %c0_i32_0 = arith.constant 0 : i32
    return %c0_i32, %arg1 : i32, i32
  }
  func.func @transform_3(%arg0: i32, %arg1: i32, %arg2: i32) -> (i32, i32) {
    %c0_i32 = arith.constant 0 : i32
    return %arg0, %arg1 : i32, i32
  }
}

</mosaic_0001>

<llo_original>
// kernel: tpu_custom_call.1
$region0: #{tpu_custom_call.1}
  #allocation0 [shape = 'u32[]', space=smem, size = 0x4, offset = 0x4, fixed_abs, tag = 'smem constant byte address 0x4 - core index']
  #allocation1 [shape = 'u32[72,128]{1,0:T(1,128)}', space=vmem, size = 0x9000, scoped, tag = 'internal scratch']
  %s0 = inlined_call_operand.hbm [shape: bf16[8,32], index: 0, kind: input, shape index: {}]
  %s1 = inlined_call_operand.hbm [shape: bf16[32,128], index: 1, kind: input, shape index: {}]
  %s2 = inlined_call_operand.vmem [shape: f32[1,128], index: 2, kind: input, shape index: {}]
  %s3 = inlined_call_operand.hbm [shape: f32[8,128], index: 3, kind: output, shape index: {}]
  %s4 = sld [smem:[#allocation0]]
  $region38: #{tpu_custom_call.1} parent=0
    _
  %s6 = ssub.s32 1, %s4
  %s7 = scalar_select 0, %s6, %s4
  $region1: #{tpu_custom_call.1} parent=0
    #allocation2 [shape = 'u8[2048]{0}', space=vmem, size = 0x800, scoped, tag = 'input window, operand 0, single buffered']
    #allocation3 [shape = 's32[1]{0}', space=sflag, size = 0x4, scoped, tag = 'scoped memory for tpu_custom_call.1']
    #allocation4 [shape = 's32[1]{0}', space=sflag, size = 0x4, scoped, tag = 'scoped memory for tpu_custom_call.1']
    #allocation5 [shape = 'u8[8192]{0}', space=vmem, size = 0x2000, scoped, tag = 'input window, operand 1, single buffered']
    #allocation6 [shape = 's32[1]{0}', space=sflag, size = 0x4, scoped, tag = 'scoped memory for tpu_custom_call.1']
    #allocation7 [shape = 'u8[4096]{0}', space=vmem, size = 0x1000, scoped, tag = 'output window, operand 0, single buffered']
    %8 = vsyncpa [#allocation3], 0
    %9 = vsyncpa [#allocation6], 0
    %10 = vsyncpa [#allocation4], 0
    // Predicated region
    $region2: #{tpu_custom_call.1} parent=1 // pred_check
      _
    $region3: #{tpu_custom_call.1} parent=1 // pred_check_branch
      %12 = sbr.rel (0) target = $region5
    $region4: #{tpu_custom_call.1} parent=1 // pred_region
      %14 = vsyncadd [#allocation3], 0
      %s16 = sshll.u32 %s0, 4
      %s17 = int_to_ptr.hbm [resolvable:$true] %s16
      %s18 = sshll.u32 [#allocation2], 4
      %s19 = int_to_ptr.vmem [resolvable:$true] %s18
      %21 = dma.hbm_to_vmem [thread:$0]  %s17, 64, %s19, [#allocation3]
    $region5: #{tpu_custom_call.1} parent=1 // pred_fallthru
      _
    // Predicated region
    $region6: #{tpu_custom_call.1} parent=1 // pred_check
      _
    $region7: #{tpu_custom_call.1} parent=1 // pred_check_branch
      %23 = sbr.rel (0) target = $region9
    $region8: #{tpu_custom_call.1} parent=1 // pred_region
      %25 = vsyncadd [#allocation6], 0
      %s26 = sshll.u32 %s1, 4
      %s27 = int_to_ptr.hbm [resolvable:$true] %s26
      %s28 = sshll.u32 [#allocation5], 4
      %s29 = int_to_ptr.vmem [resolvable:$true] %s28
      %34 = dma.hbm_to_vmem [thread:$0]  %s27, 256, %s29, [#allocation6], 64, 64, 4
    $region9: #{tpu_custom_call.1} parent=1 // pred_fallthru
      _
    // Predicated region
    $region10: #{tpu_custom_call.1} parent=1 // pred_check
      _
    $region11: #{tpu_custom_call.1} parent=1 // pred_check_branch
      %36 = sbr.rel (0) target = $region13
    $region12: #{tpu_custom_call.1} parent=1 // pred_region
      _
    $region13: #{tpu_custom_call.1} parent=1 // pred_fallthru
      _
    // Predicated region
    $region14: #{tpu_custom_call.1} parent=1 // pred_check
      _
    $region15: #{tpu_custom_call.1} parent=1 // pred_check_branch
      %38 = sbr.rel (0) target = $region17
    $region16: #{tpu_custom_call.1} parent=1 // pred_region
      %40 = dma.done [#allocation3], 64
    $region17: #{tpu_custom_call.1} parent=1 // pred_fallthru
      _
    // Predicated region
    $region18: #{tpu_custom_call.1} parent=1 // pred_check
      _
    $region19: #{tpu_custom_call.1} parent=1 // pred_check_branch
      %42 = sbr.rel (0) target = $region21
    $region20: #{tpu_custom_call.1} parent=1 // pred_region
      %44 = dma.done [#allocation6], 256
    $region21: #{tpu_custom_call.1} parent=1 // pred_fallthru
      _
    %p46 = scmp.eq.s32.totalorder 0, 0
    // Predicated region
    $region22: #{tpu_custom_call.1} parent=1 // pred_check
      %p47 = pneg %p46
    $region23: #{tpu_custom_call.1} parent=1 // pred_check_branch
      %49 = sbr.rel (%p47) target = $region25
    $region24: #{tpu_custom_call.1} parent=1 // pred_region
      %50 = vst [vmem:[#allocation7] sm:$0xff] 0.0
    $region25: #{tpu_custom_call.1} parent=1 // pred_fallthru
      _
    %v51 = vld [vmem:[#allocation7] sm:$0xff]
    %v52 = vld [vmem:[#allocation2] sm:$0xf]
    %v53 = vld [vmem:[#allocation5] sm:$0xf]
    %v54 = vld [vmem:[#allocation5 + $0x4] sm:$0xf]
    %v55 = vld [vmem:[#allocation5 + $0x8] sm:$0xf]
    %v56 = vld [vmem:[#allocation5 + $0xc] sm:$0xf]
    %v61 = vunpack.c.l.b16 %v53
    %v62 = vunpack.c.l.b16 %v54
    %v63 = vunpack.c.l.b16 %v55
    %v64 = vunpack.c.l.b16 %v56
    %v65 = vpack.c.b16 %v62, %v61
    %v66 = vpack.c.b16 %v64, %v63
    %vm69 = vcmask 261120
    %v71 = vsel %vm69, %v52, 0
    %73 = vmatpush.bf16.msra.mxu0 0
    %74 = vmatpush.bf16.msra.mxu0 0
    %75 = vmatpush.bf16.msra.mxu0 0
    %76 = vmatpush.bf16.msra.mxu0 0
    %77 = vmatpush.bf16.msra.mxu0 0
    %78 = vmatpush.bf16.msra.mxu0 0
    %79 = vmatpush.bf16.msra.mxu0 %v66
    %80 = vmatpush.bf16.msra.mxu0 %v65
    %81 = vmatmul.bf16.gmra.mxu0 %v71
    %v82 = vpop.f32.mrf.mxu0
    %v83 = vadd.f32 0.0, %v82
    %v84 = vpop.f32.mrf.mxu0
    %85 = vdwg.mxu0
    %v86 = vadd.f32 %v51, %v83
    %87 = vst [vmem:[#allocation7] sm:$0xff] %v86
    // Predicated region
    $region26: #{tpu_custom_call.1} parent=1 // pred_check
      %p88 = pneg %p46
    $region27: #{tpu_custom_call.1} parent=1 // pred_check_branch
      %90 = sbr.rel (%p88) target = $region29
    $region28: #{tpu_custom_call.1} parent=1 // pred_region
      %v91 = vld [vmem:[#allocation7] sm:$0xff]
      %v92 = vld [vmem:[%s2] sm:$0x1]
      %v94 = vperm.slane %v92, 0
      %v96 = vadd.f32 %v91, %v94
      %v97 = vmax.f32 %v96, 0.0
      %98 = vst [vmem:[#allocation7] sm:$0xff] %v97
    $region29: #{tpu_custom_call.1} parent=1 // pred_fallthru
      _
    // Predicated region
    $region30: #{tpu_custom_call.1} parent=1 // pred_check
      _
    $region31: #{tpu_custom_call.1} parent=1 // pred_check_branch
      %100 = sbr.rel (0) target = $region33
    $region32: #{tpu_custom_call.1} parent=1 // pred_region
      %102 = vsyncadd [#allocation4], 0
      %s104 = sshll.u32 [#allocation7], 4
      %s105 = int_to_ptr.vmem [resolvable:$true] %s104
      %s106 = sshll.u32 %s3, 4
      %s107 = int_to_ptr.hbm [resolvable:$true] %s106
      %109 = dma.vmem_to_hbm [thread:$0]  %s105, 128, %s107, [#allocation4]
    $region33: #{tpu_custom_call.1} parent=1 // pred_fallthru
      _
    // Predicated region
    $region34: #{tpu_custom_call.1} parent=1 // pred_check
      _
    $region35: #{tpu_custom_call.1} parent=1 // pred_check_branch
      %111 = sbr.rel (0) target = $region37
    $region36: #{tpu_custom_call.1} parent=1 // pred_region
      %113 = dma.done [#allocation4], 128
    $region37: #{tpu_custom_call.1} parent=1 // pred_fallthru
      _
    %114 = vsyncpa [#allocation3], 1
    %115 = vsyncpa [#allocation6], 1
    %116 = vsyncpa [#allocation4], 1

</llo_original>
